<compile_context>
chip_gen: v6e
topology: v6e:2x2x1
jax: 0.10.0
libtpu: 0.0.40
codegen_flags: <defaults>
</compile_context>

<pallas_src>
import functools

import jax
import jax.numpy as jnp
from jax import lax
from jax.experimental import pallas as pl
from jax.experimental.pallas import tpu as pltpu

EPS = 1e-5
GROWTH = 32
BN_SIZE = 4
BLOCK_CONFIG = (6, 12, 24, 16)
NUM_INIT_FEATURES = 64
VMEM_LIMIT = 32 * 1024 * 1024


def _round_up(x, m):
    return ((x + m - 1) // m) * m


def _tm_for(m):
    if m >= 2048:
        return 512
    if m >= 512:
        return 256
    return 128


# -----------------------------------------------------------------------------
# Fused [BN+ReLU prologue] -> bf16 matmul (f32 acc) -> [BN+ReLU epilogue]
# -----------------------------------------------------------------------------
def _mm_kernel(has_pre, has_post, *refs):
    if has_pre and has_post:
        a_ref, b_ref, ps_ref, pb_ref, qs_ref, qb_ref, o_ref = refs
    elif has_pre:
        a_ref, b_ref, ps_ref, pb_ref, o_ref = refs
    elif has_post:
        a_ref, b_ref, qs_ref, qb_ref, o_ref = refs
    else:
        a_ref, b_ref, o_ref = refs

    a = a_ref[...]                                            # (TM, Kf) bf16
    if has_pre:                                               # BN + ReLU on input
        a = jnp.maximum(a.astype(jnp.float32) * ps_ref[...] + pb_ref[...], 0.0)
        a = a.astype(jnp.bfloat16)
    acc = jnp.dot(a, b_ref[...], preferred_element_type=jnp.float32)
    if has_post:                                              # BN + ReLU on output
        acc = jnp.maximum(acc * qs_ref[...] + qb_ref[...], 0.0)
    o_ref[...] = acc.astype(o_ref.dtype)


def _a_block_spec(tm, kf, grid_m):
    # Deeper pipelining on the only streaming operand (A) when the grid is deep.
    if grid_m >= 3 and hasattr(pl, "Buffered"):
        try:
            return pl.BlockSpec((tm, kf), lambda i: (i, 0),
                                pipeline_mode=pl.Buffered(3))
        except TypeError:
            pass
    return pl.BlockSpec((tm, kf), lambda i: (i, 0))


def _conv_mm(a_p, w_p, pre, post, *, tm):
    """a_p: (Mpad, Ka >= Kf) bf16; w_p: (Kf, Npad) bf16 -> (Mpad, Npad) bf16."""
    Mpad = a_p.shape[0]
    Kf, Npad = w_p.shape
    grid_m = Mpad // tm
    has_pre = pre is not None
    has_post = post is not None

    in_specs = [_a_block_spec(tm, Kf, grid_m),
                pl.BlockSpec((Kf, Npad), lambda i: (0, 0))]   # VMEM-resident B
    args = [a_p, w_p]
    if has_pre:
        in_specs += [pl.BlockSpec((1, Kf), lambda i: (0, 0)),
                     pl.BlockSpec((1, Kf), lambda i: (0, 0))]
        args += [pre[0], pre[1]]
    if has_post:
        in_specs += [pl.BlockSpec((1, Npad), lambda i: (0, 0)),
                     pl.BlockSpec((1, Npad), lambda i: (0, 0))]
        args += [post[0], post[1]]

    return pl.pallas_call(
        functools.partial(_mm_kernel, has_pre, has_post),
        out_shape=jax.ShapeDtypeStruct((Mpad, Npad), jnp.bfloat16),
        grid_spec=pltpu.PrefetchScalarGridSpec(
            num_scalar_prefetch=0,
            grid=(grid_m,),
            in_specs=in_specs,
            out_specs=pl.BlockSpec((tm, Npad), lambda i: (i, 0))),
        compiler_params=pltpu.CompilerParams(
            dimension_semantics=("parallel",),
            vmem_limit_bytes=VMEM_LIMIT),
    )(*args)


# -----------------------------------------------------------------------------
# 3x3 / s1 / p1 conv with in-kernel im2col (9 shifted dots on the flat image)
# -----------------------------------------------------------------------------
def _conv3_kernel(w_img, hw, x_ref, w_ref, o_ref, acc_ref):
    # x_ref: (1, hw + 2*(w_img+1), 128) bf16  -- row-padded flat image
    # w_ref: (1152, 32) bf16, rows ordered (kh, kw, cin)
    # o_ref: (1, hw, 32) bf16 ; acc_ref: (hw, 32) f32 VMEM scratch
    p = w_img + 1
    wpos = lax.broadcasted_iota(jnp.int32, (hw, 1), 0) % w_img
    acc_ref[...] = jnp.zeros_like(acc_ref)
    for kh in range(3):
        for kw in range(3):
            start = p + (kh - 1) * w_img + (kw - 1)
            a = x_ref[0, start:start + hw, :]
            if kw == 0:       # mask wrap-around reads at the left image border
                a = jnp.where(wpos != 0, a, jnp.zeros_like(a))
            elif kw == 2:     # mask wrap-around reads at the right image border
                a = jnp.where(wpos != w_img - 1, a, jnp.zeros_like(a))
            wk = w_ref[(kh * 3 + kw) * 128:(kh * 3 + kw + 1) * 128, :]
            acc_ref[...] += jnp.dot(a, wk, preferred_element_type=jnp.float32)
    o_ref[0, :, :] = acc_ref[...].astype(o_ref.dtype)


def _conv3x3(y_flat, w2, n, h, w):
    """y_flat: (n*h*w, 128) bf16 -> (n, h*w, 32) bf16."""
    hw = h * w
    p = w + 1
    x3 = jnp.pad(y_flat.reshape(n, hw, 128), ((0, 0), (p, p), (0, 0)))
    return pl.pallas_call(
        functools.partial(_conv3_kernel, w, hw),
        out_shape=jax.ShapeDtypeStruct((n, hw, GROWTH), jnp.bfloat16),
        grid_spec=pltpu.PrefetchScalarGridSpec(
            num_scalar_prefetch=0,
            grid=(n,),
            in_specs=[pl.BlockSpec((1, hw + 2 * p, 128), lambda i: (i, 0, 0)),
                      pl.BlockSpec((9 * 128, GROWTH), lambda i: (0, 0))],
            out_specs=pl.BlockSpec((1, hw, GROWTH), lambda i: (i, 0, 0)),
            scratch_shapes=[pltpu.VMEM((hw, GROWTH), jnp.float32)]),
        compiler_params=pltpu.CompilerParams(
            dimension_semantics=("parallel",),
            vmem_limit_bytes=VMEM_LIMIT),
    )(x3, w2)


# -----------------------------------------------------------------------------
# norm5 + ReLU + adaptive_avg_pool2d((1,1)) + flatten
# -----------------------------------------------------------------------------
def _gap_kernel(x_ref, s_ref, b_ref, o_ref):
    x = x_ref[...].astype(jnp.float32)                        # (1, HW, C)
    y = jnp.maximum(x * s_ref[...] + b_ref[...], 0.0)
    o_ref[...] = jnp.mean(y, axis=1, keepdims=True)           # (1, 1, C)


@functools.partial(jax.jit, static_argnames=("n", "h", "w"))
def _head(slab, n5s, n5b, *, n, h, w):
    c = slab.shape[1]
    m = n * h * w
    x3 = slab[:m].reshape(n, h * w, c)
    out = pl.pallas_call(
        _gap_kernel,
        out_shape=jax.ShapeDtypeStruct((n, 1, c), jnp.float32),
        grid_spec=pltpu.PrefetchScalarGridSpec(
            num_scalar_prefetch=0,
            grid=(n,),
            in_specs=[pl.BlockSpec((1, h * w, c), lambda i: (i, 0, 0)),
                      pl.BlockSpec((1, 1, c), lambda i: (0, 0, 0)),
                      pl.BlockSpec((1, 1, c), lambda i: (0, 0, 0))],
            out_specs=pl.BlockSpec((1, 1, c), lambda i: (i, 0, 0))),
        compiler_params=pltpu.CompilerParams(
            dimension_semantics=("parallel",),
            vmem_limit_bytes=VMEM_LIMIT),
    )(x3, n5s, n5b)
    return out.reshape(n, c)


# -----------------------------------------------------------------------------
# Stem: conv0 (7x7/s2/p3) + norm0 + relu0 (epilogue) + 3x3/s2/p1 max pool
# -----------------------------------------------------------------------------
@jax.jit
def _stem(x_nchw, w0, n0s, n0b):
    x = jnp.transpose(x_nchw, (0, 2, 3, 1)).astype(jnp.bfloat16)   # NCHW -> NHWC
    n, h, w, cin = x.shape
    k, stride, pad = 7, 2, 3
    ho = (h + 2 * pad - k) // stride + 1
    wo = (w + 2 * pad - k) // stride + 1
    xp = jnp.pad(x, ((0, 0), (pad, pad), (pad, pad), (0, 0)))
    cols = [xp[:, i:i + ho * stride:stride, j:j + wo * stride:stride, :]
            for i in range(k) for j in range(k)]
    a = jnp.concatenate(cols, axis=-1).reshape(n * ho * wo, k * k * cin)
    m = n * ho * wo
    tm = _tm_for(m)
    mpad = _round_up(m, tm)
    kf = w0.shape[0]
    a_p = jnp.pad(a, ((0, mpad - m), (0, kf - k * k * cin)))
    y = _conv_mm(a_p, w0, pre=None, post=(n0s, n0b), tm=tm)
    y = y[:m, :NUM_INIT_FEATURES].reshape(n, ho, wo, NUM_INIT_FEATURES)
    # 3x3 / s2 / p1 max pool via pairwise strided maxima (no slab materialized).
    hp = (ho + 2 - 3) // 2 + 1
    wp = (wo + 2 - 3) // 2 + 1
    neg = float(jnp.finfo(jnp.bfloat16).min)
    yp = jnp.pad(y, ((0, 0), (1, 1), (1, 1), (0, 0)), constant_values=neg)
    out = None
    for i in range(3):
        for j in range(3):
            win = yp[:, i:i + hp * 2:2, j:j + wp * 2:2, :]
            out = win if out is None else jnp.maximum(out, win)
    return out


# -----------------------------------------------------------------------------
# Dense layer: norm1+relu+1x1conv+norm2+relu (one matmul kernel, reading the
# block slab prefix directly) -> in-kernel-im2col 3x3 conv -> slab writeback.
# -----------------------------------------------------------------------------
@functools.partial(jax.jit,
                   static_argnames=("n", "h", "w", "tm"),
                   donate_argnames=("slab",))
def _dense_layer(slab, w1, n1s, n1b, n2s, n2b, w2, c_off, *, n, h, w, tm):
    m = n * h * w
    y1 = _conv_mm(slab, w1, pre=(n1s, n1b), post=(n2s, n2b), tm=tm)   # (Mpad, 128)
    y2 = _conv3x3(y1[:m], w2, n, h, w)                                # (n, hw, 32)
    starts = (jnp.asarray(0, jnp.int32), jnp.asarray(c_off, jnp.int32))
    return lax.dynamic_update_slice(slab, y2.reshape(m, GROWTH), starts)


# -----------------------------------------------------------------------------
# Transition: norm+relu (prologue) + 1x1 conv + 2x2/s2 avg pool (bf16)
# -----------------------------------------------------------------------------
@functools.partial(jax.jit, static_argnames=("n", "h", "w", "tm"))
def _transition(slab, wt, ts, tb, *, n, h, w, tm):
    m = n * h * w
    cout = wt.shape[1]
    y = _conv_mm(slab, wt, pre=(ts, tb), post=None, tm=tm)[:m]
    y = y.reshape(n, h, w, cout)
    return (y[:, ::2, ::2, :] + y[:, 1::2, ::2, :]
            + y[:, ::2, 1::2, :] + y[:, 1::2, 1::2, :]) * 0.25


def _make_slab(x_nhwc, c_final, tm):
    n, h, w, c = x_nhwc.shape
    m = n * h * w
    mpad = _round_up(m, tm)
    return jnp.pad(x_nhwc.reshape(m, c), ((0, mpad - m), (0, c_final - c)))


# -----------------------------------------------------------------------------
# DenseNet-121 parameters (deterministic synthetic init, pre-padded / bf16)
# -----------------------------------------------------------------------------
def make_params(key):
    keys = iter(jax.random.split(key, 2048))

    def conv_w(rows, cout, fan_in, kpad, npad):
        w = (jax.random.normal(next(keys), (rows, cout), jnp.float32)
             * jnp.sqrt(2.0 / fan_in))
        return jnp.pad(w, ((0, kpad - rows), (0, npad - cout))).astype(jnp.bfloat16)

    def bn_sb(c, pad_to):
        gamma = 1.0 + 0.1 * jax.random.normal(next(keys), (c,), jnp.float32)
        beta = 0.1 * jax.random.normal(next(keys), (c,), jnp.float32)
        mean = 0.1 * jax.random.normal(next(keys), (c,), jnp.float32)
        var = 0.5 + jax.random.uniform(next(keys), (c,), jnp.float32)
        scale = gamma / jnp.sqrt(var + EPS)
        bias = beta - mean * scale
        s = jnp.pad(scale, (0, pad_to - c)).reshape(1, pad_to)
        b = jnp.pad(bias, (0, pad_to - c)).reshape(1, pad_to)
        return s, b

    params = {"conv0_w": conv_w(7 * 7 * 3, NUM_INIT_FEATURES, 7 * 7 * 3,
                                _round_up(7 * 7 * 3, 128), 128)}
    params["n0s"], params["n0b"] = bn_sb(NUM_INIT_FEATURES, 128)

    c = NUM_INIT_FEATURES
    blocks = []
    for bi, n_layers in enumerate(BLOCK_CONFIG):
        layers = []
        for _ in range(n_layers):
            kf = _round_up(c, 128)
            lp = {}
            lp["n1s"], lp["n1b"] = bn_sb(c, kf)                    # prologue of conv1
            lp["w1"] = conv_w(c, BN_SIZE * GROWTH, c, kf, BN_SIZE * GROWTH)
            lp["n2s"], lp["n2b"] = bn_sb(BN_SIZE * GROWTH, BN_SIZE * GROWTH)
            lp["w2"] = conv_w(9 * BN_SIZE * GROWTH, GROWTH, 9 * BN_SIZE * GROWTH,
                              9 * BN_SIZE * GROWTH, GROWTH)        # (1152, 32)
            layers.append(lp)
            c += GROWTH
        block = {"layers": layers}
        if bi != len(BLOCK_CONFIG) - 1:
            block["ts"], block["tb"] = bn_sb(c, c)
            block["tw"] = conv_w(c, c // 2, c, c, c // 2)
            c //= 2
        blocks.append(block)
    params["blocks"] = blocks
    n5s, n5b = bn_sb(c, c)                                         # c == 1024
    params["n5s"] = n5s.reshape(1, 1, c)
    params["n5b"] = n5b.reshape(1, 1, c)
    return params


# -----------------------------------------------------------------------------
# Forward pass (== DenseNet._forward_impl)
# -----------------------------------------------------------------------------
def densenet_forward(params, x_nchw):
    x = _stem(x_nchw, params["conv0_w"], params["n0s"], params["n0b"])
    n, h, w, _ = x.shape
    c = NUM_INIT_FEATURES
    out = None
    for bi, n_layers in enumerate(BLOCK_CONFIG):
        block = params["blocks"][bi]
        c_final = c + n_layers * GROWTH                            # always 128-aligned
        tm = _tm_for(n * h * w)
        slab = _make_slab(x, c_final, tm)
        for lp in block["layers"]:
            slab = _dense_layer(slab, lp["w1"], lp["n1s"], lp["n1b"],
                                lp["n2s"], lp["n2b"], lp["w2"], c,
                                n=n, h=h, w=w, tm=tm)
            c += GROWTH
        if bi != len(BLOCK_CONFIG) - 1:
            x = _transition(slab, block["tw"], block["ts"], block["tb"],
                            n=n, h=h, w=w, tm=tm)
            c //= 2
            h //= 2
            w //= 2
        else:
            out = _head(slab, params["n5s"], params["n5b"], n=n, h=h, w=w)
    return out


if __name__ == "__main__":
    key = jax.random.PRNGKey(0)
    pkey, xkey = jax.random.split(key)
    params = make_params(pkey)
    # Small but structure-consistent input: 3 channels (ImageNet-style), 32x32
    # spatial so every stride-2 stage of DenseNet-121 stays >= 1x1.
    x = jax.random.normal(xkey, (2, 3, 32, 32), jnp.float32)       # NCHW
    out = densenet_forward(params, x)
    out = jax.block_until_ready(out)
    assert out.shape == (2, 1024), out.shape
    assert bool(jnp.all(jnp.isfinite(out)))
    print("KERNEL_OK")
</pallas_src>

<mosaic_0001>
module attributes {stable_mosaic.version = 11 : i64} {
  func.func @_mm_kernel(%arg0: i32, %arg1: memref<256x256xbf16, #tpu.memory_space<vmem>>, %arg2: memref<256x128xbf16, #tpu.memory_space<vmem>>, %arg3: memref<1x128xf32, #tpu.memory_space<vmem>>, %arg4: memref<1x128xf32, #tpu.memory_space<vmem>>, %arg5: memref<256x128xbf16, #tpu.memory_space<vmem>>) attributes {dimension_semantics = [#tpu.dimension_semantics<parallel>], iteration_bounds = array<i64: 2>, scalar_prefetch = 0 : i64, scratch_operands = 0 : i64, tpu.core_type = #tpu.core_type<tc>, window_params = [{transform_indices = @transform_0, window_bounds = array<i64: 256, 256>}, {pipeline_mode = #tpu.pipeline_mode<synchronous>, transform_indices = @transform_1, window_bounds = array<i64: 256, 128>}, {pipeline_mode = #tpu.pipeline_mode<synchronous>, transform_indices = @transform_2, window_bounds = array<i64: 1, 128>}, {pipeline_mode = #tpu.pipeline_mode<synchronous>, transform_indices = @transform_3, window_bounds = array<i64: 1, 128>}, {transform_indices = @transform_4, window_bounds = array<i64: 256, 128>}]} {
    %c0 = arith.constant 0 : index
    %c0_0 = arith.constant 0 : index
    %0 = vector.load %arg1[%c0, %c0_0] : memref<256x256xbf16, #tpu.memory_space<vmem>>, vector<256x256xbf16>
    %c0_1 = arith.constant 0 : index
    %c0_2 = arith.constant 0 : index
    %1 = vector.load %arg2[%c0_1, %c0_2] : memref<256x128xbf16, #tpu.memory_space<vmem>>, vector<256x128xbf16>
    %cst = arith.constant dense<0.000000e+00> : vector<256x128xf32>
    %2 = tpu.matmul %0, %1, %cst {dimension_numbers = #tpu.dot_dimension_numbers<[1], [0], [0], [1], [0, 0, 1, 1], [], []>} : vector<256x256xbf16>, vector<256x128xbf16>, vector<256x128xf32> -> vector<256x128xf32>
    %c0_3 = arith.constant 0 : index
    %c0_4 = arith.constant 0 : index
    %3 = vector.load %arg3[%c0_3, %c0_4] : memref<1x128xf32, #tpu.memory_space<vmem>>, vector<1x128xf32>
    %4 = vector.broadcast %3 : vector<1x128xf32> to vector<256x128xf32>
    %5 = arith.mulf %2, %4 : vector<256x128xf32>
    %c0_5 = arith.constant 0 : index
    %c0_6 = arith.constant 0 : index
    %6 = vector.load %arg4[%c0_5, %c0_6] : memref<1x128xf32, #tpu.memory_space<vmem>>, vector<1x128xf32>
    %7 = vector.broadcast %6 : vector<1x128xf32> to vector<256x128xf32>
    %8 = arith.addf %5, %7 : vector<256x128xf32>
    %cst_7 = arith.constant 0.000000e+00 : f32
    %9 = vector.broadcast %cst_7 : f32 to vector<256x128xf32>
    %10 = arith.maximumf %8, %9 : vector<256x128xf32>
    %11 = arith.truncf %10 : vector<256x128xf32> to vector<256x128xbf16>
    %c0_8 = arith.constant 0 : index
    %c0_9 = arith.constant 0 : index
    %12 = vector.load %arg5[%c0_8, %c0_9] : memref<256x128xbf16, #tpu.memory_space<vmem>>, vector<256x128xbf16>
    tpu.vector_store %arg5[%c0_8, %c0_9], %11 {strides = array<i32>} : memref<256x128xbf16, #tpu.memory_space<vmem>>, vector<256x128xbf16>,
    return
  }
  func.func @transform_0(%arg0: i32) -> (i32, i32) {
    %c0_i32 = arith.constant 0 : i32
    %c0_i32_0 = arith.constant 0 : i32
    return %arg0, %c0_i32 : i32, i32
  }
  func.func @transform_1(%arg0: i32) -> (i32, i32) {
    %c0_i32 = arith.constant 0 : i32
    %c0_i32_0 = arith.constant 0 : i32
    %c0_i32_1 = arith.constant 0 : i32
    return %c0_i32, %c0_i32_0 : i32, i32
  }
  func.func @transform_2(%arg0: i32) -> (i32, i32) {
    %c0_i32 = arith.constant 0 : i32
    %c0_i32_0 = arith.constant 0 : i32
    %c0_i32_1 = arith.constant 0 : i32
    return %c0_i32, %c0_i32_0 : i32, i32
  }
  func.func @transform_3(%arg0: i32) -> (i32, i32) {
    %c0_i32 = arith.constant 0 : i32
    %c0_i32_0 = arith.constant 0 : i32
    %c0_i32_1 = arith.constant 0 : i32
    return %c0_i32, %c0_i32_0 : i32, i32
  }
  func.func @transform_4(%arg0: i32) -> (i32, i32) {
    %c0_i32 = arith.constant 0 : i32
    %c0_i32_0 = arith.constant 0 : i32
    return %arg0, %c0_i32 : i32, i32
  }
}

</mosaic_0001>

<llo_original>
// kernel: _stem.1
$region0: #{_stem.1}
  #allocation0 [shape = 'u32[]', space=smem, size = 0x4, offset = 0x4, fixed_abs, tag = 'smem constant byte address 0x4 - core index']
  #allocation1 [shape = 'u32[144,128]{1,0:T(1,128)}', space=vmem, size = 0x12000, scoped, tag = 'internal scratch']
  %s0 = inlined_call_operand.vmem [shape: bf16[512,256], index: 0, kind: input, shape index: {}]
  %s1 = inlined_call_operand.vmem [shape: bf16[256,128], index: 1, kind: input, shape index: {}]
  %s2 = inlined_call_operand.vmem [shape: f32[1,128], index: 2, kind: input, shape index: {}]
  %s3 = inlined_call_operand.vmem [shape: f32[1,128], index: 3, kind: input, shape index: {}]
  %s4 = inlined_call_operand.vmem [shape: bf16[512,128], index: 4, kind: output, shape index: {}]
  %s5 = sld [smem:[#allocation0]]
  $region49: #{_stem.1} parent=0
    _
  %s7 = ssub.s32 1, %s5
  %s8 = scalar_select 0, %s7, %s5
  loop: start=0, step=1, limit=4
  $region2: #{_stem.1} parent=0 // loop_pre_header
    _
  $region3: #{_stem.1} parent=0 // loop_header
    %s10 = sphi 0, %s14
    %p11 = scmp.ge.s32.totalorder %s10, 4
    %s20 = sphi 0, %s22
    %s23 = sphi 0, %s20
    %s24 = sphi 0, %s23
    %s40 = sphi 0, %s24
    %s44 = sphi 0, %s44
    %s46 = sphi 0, %s44
    %s47 = sphi 0, %s46
    %s61 = sphi 0, %s47
    %s65 = sphi 0, %s65
    %s67 = sphi 0, %s65
    %s68 = sphi 0, %s67
    %s82 = sphi 0, %s68
    %s86 = sphi 0, %s86
    %s88 = sphi 0, %s86
    %s89 = sphi 0, %s88
    %s103 = sphi 0, %s89
    %s109 = sphi 0, %s111
    %s112 = sphi 0, %s109
    %s113 = sphi 0, %s112
    %s129 = sphi 0, %s113
  $region4: #{_stem.1} parent=0 // loop_header_branch
    %13 = sbr.rel (%p11) target = $region8
  $region5: #{_stem.1} parent=0 // loop_body
    %s15 = ssub.s32 %s10, 1
    %s16 = ssub.s32 %s10, 2
    %s17 = sadd.s32 %s10, 1
    %s18 = ssub.s32 %s10, %s17
    %p19 = scmp.eq.s32.totalorder %s18, 0
    %s21 = sadd.s32 %s20, 1
    %s22 = scalar_select %p19, %s20, %s21
    %p25 = pneg %p19
    %p26 = scmp.eq.s32.totalorder %s10, 1
    %p27 = por %p25, %p26
    %p28 = scmp.ne.s32.totalorder %s20, %s23
    %p29 = scmp.eq.s32.totalorder %s10, 0
    %p30 = por %p28, %p29
    %p31 = scmp.ne.s32.totalorder %s20, %s23
    %p32 = scmp.eq.s32.totalorder %s15, 1
    %p33 = por %p31, %p32
    %p34 = scmp.ne.s32.totalorder %s23, %s24
    %p35 = scmp.eq.s32.totalorder %s15, 0
    %p36 = por %p34, %p35
    %p37 = scmp.ne.s32.totalorder %s23, %s24
    %p38 = scmp.eq.s32.totalorder %s16, 1
    %p39 = por %p37, %p38
    %p41 = scmp.ne.s32.totalorder %s24, %s40
    %p42 = scmp.eq.s32.totalorder %s16, 0
    %p43 = por %p41, %p42
    %s45 = sadd.s32 %s44, 1
    %p48 = scmp.eq.s32.totalorder %s10, 1
    %p49 = scmp.ne.s32.totalorder %s44, %s46
    %p50 = scmp.eq.s32.totalorder %s10, 0
    %p51 = por %p49, %p50
    %p52 = scmp.ne.s32.totalorder %s44, %s46
    %p53 = scmp.eq.s32.totalorder %s15, 1
    %p54 = por %p52, %p53
    %p55 = scmp.ne.s32.totalorder %s46, %s47
    %p56 = scmp.eq.s32.totalorder %s15, 0
    %p57 = por %p55, %p56
    %p58 = scmp.ne.s32.totalorder %s46, %s47
    %p59 = scmp.eq.s32.totalorder %s16, 1
    %p60 = por %p58, %p59
    %p62 = scmp.ne.s32.totalorder %s47, %s61
    %p63 = scmp.eq.s32.totalorder %s16, 0
    %p64 = por %p62, %p63
    %s66 = sadd.s32 %s65, 1
    %p69 = scmp.eq.s32.totalorder %s10, 1
    %p70 = scmp.ne.s32.totalorder %s65, %s67
    %p71 = scmp.eq.s32.totalorder %s10, 0
    %p72 = por %p70, %p71
    %p73 = scmp.ne.s32.totalorder %s65, %s67
    %p74 = scmp.eq.s32.totalorder %s15, 1
    %p75 = por %p73, %p74
    %p76 = scmp.ne.s32.totalorder %s67, %s68
    %p77 = scmp.eq.s32.totalorder %s15, 0
    %p78 = por %p76, %p77
    %p79 = scmp.ne.s32.totalorder %s67, %s68
    %p80 = scmp.eq.s32.totalorder %s16, 1
    %p81 = por %p79, %p80
    %p83 = scmp.ne.s32.totalorder %s68, %s82
    %p84 = scmp.eq.s32.totalorder %s16, 0
    %p85 = por %p83, %p84
    %s87 = sadd.s32 %s86, 1
    %p90 = scmp.eq.s32.totalorder %s10, 1
    %p91 = scmp.ne.s32.totalorder %s86, %s88
    %p92 = scmp.eq.s32.totalorder %s10, 0
    %p93 = por %p91, %p92
    %p94 = scmp.ne.s32.totalorder %s86, %s88
    %p95 = scmp.eq.s32.totalorder %s15, 1
    %p96 = por %p94, %p95
    %p97 = scmp.ne.s32.totalorder %s88, %s89
    %p98 = scmp.eq.s32.totalorder %s15, 0
    %p99 = por %p97, %p98
    %p100 = scmp.ne.s32.totalorder %s88, %s89
    %p101 = scmp.eq.s32.totalorder %s16, 1
    %p102 = por %p100, %p101
    %p104 = scmp.ne.s32.totalorder %s89, %s103
    %p105 = scmp.eq.s32.totalorder %s16, 0
    %p106 = por %p104, %p105
    %s107 = ssub.s32 %s10, %s17
    %p108 = scmp.eq.s32.totalorder %s107, 0
    %s110 = sadd.s32 %s109, 1
    %s111 = scalar_select %p108, %s109, %s110
    %p114 = pneg %p108
    %p115 = scmp.eq.s32.totalorder %s10, 1
    %p116 = por %p114, %p115
    %p117 = scmp.ne.s32.totalorder %s109, %s112
    %p118 = scmp.eq.s32.totalorder %s10, 0
    %p119 = por %p117, %p118
    %p120 = scmp.ne.s32.totalorder %s109, %s112
    %p121 = scmp.eq.s32.totalorder %s15, 1
    %p122 = por %p120, %p121
    %p123 = scmp.ne.s32.totalorder %s112, %s113
    %p124 = scmp.eq.s32.totalorder %s15, 0
    %p125 = por %p123, %p124
    %p126 = scmp.ne.s32.totalorder %s112, %s113
    %p127 = scmp.eq.s32.totalorder %s16, 1
    %p128 = por %p126, %p127
    %p130 = scmp.ne.s32.totalorder %s113, %s129
    %p131 = scmp.eq.s32.totalorder %s16, 0
    %p132 = por %p130, %p131
    %p133 = scmp.le.s32.totalorder 1, %s10
    %p134 = scmp.lt.s32.totalorder %s10, 3
    %p135 = pnand %p133, %p134
    %p136 = pneg %p135
    // Predicated region
    $region9: #{_stem.1} parent=5 // pred_check
      _
    $region10: #{_stem.1} parent=5 // pred_check_branch
      %138 = sbr.rel (%p135) target = $region12
    $region11: #{_stem.1} parent=5 // pred_region
      %s139 = ssub.s32 %s10, 1
      // Predicated region
      $region13: #{_stem.1} parent=11 // pred_check
        %p140 = pneg %p57
      $region14: #{_stem.1} parent=11 // pred_check_branch
        %142 = sbr.rel (%p140) target = $region16
      $region15: #{_stem.1} parent=11 // pred_region
        _
      $region16: #{_stem.1} parent=11 // pred_fallthru
        _
      // Predicated region
      $region17: #{_stem.1} parent=11 // pred_check
        %p143 = pneg %p78
      $region18: #{_stem.1} parent=11 // pred_check_branch
        %145 = sbr.rel (%p143) target = $region20
      $region19: #{_stem.1} parent=11 // pred_region
        _
      $region20: #{_stem.1} parent=11 // pred_fallthru
        _
      // Predicated region
      $region21: #{_stem.1} parent=11 // pred_check
        %p146 = pneg %p99
      $region22: #{_stem.1} parent=11 // pred_check_branch
        %148 = sbr.rel (%p146) target = $region24
      $region23: #{_stem.1} parent=11 // pred_region
        _
      $region24: #{_stem.1} parent=11 // pred_fallthru
        _
    $region12: #{_stem.1} parent=5 // pred_fallthru
      _
    %p149 = scmp.lt.s32.totalorder %s10, 2
    // Predicated region
    $region25: #{_stem.1} parent=5 // pred_check
      %p150 = pneg %p149
    $region26: #{_stem.1} parent=5 // pred_check_branch
      %152 = sbr.rel (%p150) target = $region28
    $region27: #{_stem.1} parent=5 // pred_region
      // Predicated region
      $region29: #{_stem.1} parent=27 // pred_check
        %p153 = pneg %p30
      $region30: #{_stem.1} parent=27 // pred_check_branch
        %155 = sbr.rel (%p153) target = $region32
      $region31: #{_stem.1} parent=27 // pred_region
        %s156 = smul.u32 32, %s10
        %p157 = scmp.lt.s32.totalorder %s156, 63
        %s158 = scalar_select %p157, %s156, 63
        %s159 = smul.addr %s158, 2
        %s160 = smul.addr %s159, 4
        %s161 = scalar_lea.vmem %s0, %s160
        %s162 = smul.u32 32, %s10
      $region32: #{_stem.1} parent=27 // pred_fallthru
        _
    $region28: #{_stem.1} parent=5 // pred_fallthru
      _
    %p163 = scmp.le.s32.totalorder 1, %s10
    %p164 = scmp.lt.s32.totalorder %s10, 3
    %p165 = pnand %p163, %p164
    %p166 = pneg %p165
    // Predicated region
    $region33: #{_stem.1} parent=5 // pred_check
      _
    $region34: #{_stem.1} parent=5 // pred_check_branch
      %168 = sbr.rel (%p165) target = $region36
    $region35: #{_stem.1} parent=5 // pred_region
      %s169 = ssub.s32 %s10, 1
      %s170 = smul.u32 32, %s15
      %p171 = scmp.lt.s32.totalorder %s170, 63
      %s172 = scalar_select %p171, %s170, 63
      %s173 = smul.addr %s172, 2
      %s174 = smul.addr %s173, 4
      %s175 = scalar_lea.vmem %s0, %s174
      %p176 = pneg %p36
      %p177 = pneg %p33
      %p178 = pneg %p57
      %p179 = pneg %p54
      %p180 = pneg %p78
      %p181 = pneg %p75
      %p182 = pneg %p99
      %p183 = pneg %p96
      %p184 = pneg %p125
      %p185 = pneg %p122
      %s186 = smul.u32 32, %s15
      %p187 = scmp.lt.s32.totalorder %s186, 63
      %s188 = scalar_select %p187, %s186, 63
      %s189 = smul.addr %s188, 4
      %s190 = scalar_lea.vmem %s4, %s189
      %s191 = smul.u32 32, %s15
      %p192 = scmp.lt.s32.totalorder %s191, 63
      %s193 = scalar_select %p192, %s191, 63
      %s194 = smul.addr %s193, 2
      %s195 = smul.addr %s194, 4
      %s196 = scalar_lea.vmem %s0, %s195
      %s197 = smul.u32 32, %s15
      %s198 = smul.u32 32, %s15
      %p199 = scmp.lt.s32.totalorder %s198, 63
      %s200 = scalar_select %p199, %s198, 63
      %s201 = smul.addr %s200, 4
      %s202 = scalar_lea.vmem %s4, %s201
      %s203 = smul.u32 32, %s15
      %v205 = vld [vmem:[%s196] sm:$0xff]
      %v206 = vld [vmem:[%s196 + $0x8] sm:$0xff]
      %v207 = vld [vmem:[%s196 + $0x10] sm:$0xff]
      %v208 = vld [vmem:[%s196 + $0x18] sm:$0xff]
      %v209 = vld [vmem:[%s196 + $0x20] sm:$0xff]
      %v210 = vld [vmem:[%s196 + $0x28] sm:$0xff]
      %v211 = vld [vmem:[%s196 + $0x30] sm:$0xff]
      %v212 = vld [vmem:[%s196 + $0x38] sm:$0xff]
      %v213 = vld [vmem:[%s196 + $0x40] sm:$0xff]
      %v214 = vld [vmem:[%s196 + $0x48] sm:$0xff]
      %v215 = vld [vmem:[%s196 + $0x50] sm:$0xff]
      %v216 = vld [vmem:[%s196 + $0x58] sm:$0xff]
      %v217 = vld [vmem:[%s196 + $0x60] sm:$0xff]
      %v218 = vld [vmem:[%s196 + $0x68] sm:$0xff]
      %v219 = vld [vmem:[%s196 + $0x70] sm:$0xff]
      %v220 = vld [vmem:[%s196 + $0x78] sm:$0xff]
      %v221 = vld [vmem:[%s196 + $0x80] sm:$0xff]
      %v222 = vld [vmem:[%s196 + $0x88] sm:$0xff]
      %v223 = vld [vmem:[%s196 + $0x90] sm:$0xff]
      %v224 = vld [vmem:[%s196 + $0x98] sm:$0xff]
      %v225 = vld [vmem:[%s196 + $0xa0] sm:$0xff]
      %v226 = vld [vmem:[%s196 + $0xa8] sm:$0xff]
      %v227 = vld [vmem:[%s196 + $0xb0] sm:$0xff]
      %v228 = vld [vmem:[%s196 + $0xb8] sm:$0xff]
      %v229 = vld [vmem:[%s196 + $0xc0] sm:$0xff]
      %v230 = vld [vmem:[%s196 + $0xc8] sm:$0xff]
      %v231 = vld [vmem:[%s196 + $0xd0] sm:$0xff]
      %v232 = vld [vmem:[%s196 + $0xd8] sm:$0xff]
      %v233 = vld [vmem:[%s196 + $0xe0] sm:$0xff]
      %v234 = vld [vmem:[%s196 + $0xe8] sm:$0xff]
      %v235 = vld [vmem:[%s196 + $0xf0] sm:$0xff]
      %v236 = vld [vmem:[%s196 + $0xf8] sm:$0xff]
      %v237 = vld [vmem:[%s1] sm:$0xf]
      %v238 = vld [vmem:[%s1 + $0x4] sm:$0xf]
      %v239 = vld [vmem:[%s1 + $0x8] sm:$0xf]
      %v240 = vld [vmem:[%s1 + $0xc] sm:$0xf]
      %v241 = vld [vmem:[%s1 + $0x10] sm:$0xf]
      %v242 = vld [vmem:[%s1 + $0x14] sm:$0xf]
      %v243 = vld [vmem:[%s1 + $0x18] sm:$0xf]
      %v244 = vld [vmem:[%s1 + $0x1c] sm:$0xf]
      %v245 = vld [vmem:[%s1 + $0x20] sm:$0xf]
      %v246 = vld [vmem:[%s1 + $0x24] sm:$0xf]
      %v247 = vld [vmem:[%s1 + $0x28] sm:$0xf]
      %v248 = vld [vmem:[%s1 + $0x2c] sm:$0xf]
      %v249 = vld [vmem:[%s1 + $0x30] sm:$0xf]
      %v250 = vld [vmem:[%s1 + $0x34] sm:$0xf]
      %v251 = vld [vmem:[%s1 + $0x38] sm:$0xf]
      %v252 = vld [vmem:[%s1 + $0x3c] sm:$0xf]
      %v253 = vld [vmem:[%s1 + $0x40] sm:$0xf]
      %v254 = vld [vmem:[%s1 + $0x44] sm:$0xf]
      %v255 = vld [vmem:[%s1 + $0x48] sm:$0xf]
      %v256 = vld [vmem:[%s1 + $0x4c] sm:$0xf]
      %v257 = vld [vmem:[%s1 + $0x50] sm:$0xf]
      %v258 = vld [vmem:[%s1 + $0x54] sm:$0xf]
      %v259 = vld [vmem:[%s1 + $0x58] sm:$0xf]
      %v260 = vld [vmem:[%s1 + $0x5c] sm:$0xf]
      %v261 = vld [vmem:[%s1 + $0x60] sm:$0xf]
      %v262 = vld [vmem:[%s1 + $0x64] sm:$0xf]
      %v263 = vld [vmem:[%s1 + $0x68] sm:$0xf]
      %v264 = vld [vmem:[%s1 + $0x6c] sm:$0xf]
      %v265 = vld [vmem:[%s1 + $0x70] sm:$0xf]
      %v266 = vld [vmem:[%s1 + $0x74] sm:$0xf]
      %v267 = vld [vmem:[%s1 + $0x78] sm:$0xf]
      %v268 = vld [vmem:[%s1 + $0x7c] sm:$0xf]
      %v301 = vunpack.c.l.b16 %v205
      %v302 = vunpack.c.h.b16 %v205
      %v303 = vunpack.c.l.b16 %v206
      %v304 = vunpack.c.h.b16 %v206
      %v305 = vunpack.c.l.b16 %v207
      %v306 = vunpack.c.h.b16 %v207
      %v307 = vunpack.c.l.b16 %v208
      %v308 = vunpack.c.h.b16 %v208
      %v309 = vunpack.c.l.b16 %v209
      %v310 = vunpack.c.h.b16 %v209
      %v311 = vunpack.c.l.b16 %v210
      %v312 = vunpack.c.h.b16 %v210
      %v313 = vunpack.c.l.b16 %v211
      %v314 = vunpack.c.h.b16 %v211
      %v315 = vunpack.c.l.b16 %v212
      %v316 = vunpack.c.h.b16 %v212
      %v317 = vunpack.c.l.b16 %v213
      %v318 = vunpack.c.h.b16 %v213
      %v319 = vunpack.c.l.b16 %v214
      %v320 = vunpack.c.h.b16 %v214
      %v321 = vunpack.c.l.b16 %v215
      %v322 = vunpack.c.h.b16 %v215
      %v323 = vunpack.c.l.b16 %v216
      %v324 = vunpack.c.h.b16 %v216
      %v325 = vunpack.c.l.b16 %v217
      %v326 = vunpack.c.h.b16 %v217
      %v327 = vunpack.c.l.b16 %v218
      %v328 = vunpack.c.h.b16 %v218
      %v329 = vunpack.c.l.b16 %v219
      %v330 = vunpack.c.h.b16 %v219
      %v331 = vunpack.c.l.b16 %v220
      %v332 = vunpack.c.h.b16 %v220
      %v333 = vunpack.c.l.b16 %v221
      %v334 = vunpack.c.h.b16 %v221
      %v335 = vunpack.c.l.b16 %v222
      %v336 = vunpack.c.h.b16 %v222
      %v337 = vunpack.c.l.b16 %v223
      %v338 = vunpack.c.h.b16 %v223
      %v339 = vunpack.c.l.b16 %v224
      %v340 = vunpack.c.h.b16 %v224
      %v341 = vunpack.c.l.b16 %v225
      %v342 = vunpack.c.h.b16 %v225
      %v343 = vunpack.c.l.b16 %v226
      %v344 = vunpack.c.h.b16 %v226
      %v345 = vunpack.c.l.b16 %v227
      %v346 = vunpack.c.h.b16 %v227
      %v347 = vunpack.c.l.b16 %v228
      %v348 = vunpack.c.h.b16 %v228
      %v349 = vunpack.c.l.b16 %v229
      %v350 = vunpack.c.h.b16 %v229
      %v351 = vunpack.c.l.b16 %v230
      %v352 = vunpack.c.h.b16 %v230
      %v353 = vunpack.c.l.b16 %v231
      %v354 = vunpack.c.h.b16 %v231
      %v355 = vunpack.c.l.b16 %v232
      %v356 = vunpack.c.h.b16 %v232
      %v357 = vunpack.c.l.b16 %v233
      %v358 = vunpack.c.h.b16 %v233
      %v359 = vunpack.c.l.b16 %v234
      %v360 = vunpack.c.h.b16 %v234
      %v361 = vunpack.c.l.b16 %v235
      %v362 = vunpack.c.h.b16 %v235
      %v363 = vunpack.c.l.b16 %v236
      %v364 = vunpack.c.h.b16 %v236
      %v365 = vpack.c.b16 %v303, %v301
      %v366 = vpack.c.b16 %v304, %v302
      %v367 = vpack.c.b16 %v307, %v305
      %v368 = vpack.c.b16 %v308, %v306
      %v369 = vpack.c.b16 %v311, %v309
      %v370 = vpack.c.b16 %v312, %v310
      %v371 = vpack.c.b16 %v315, %v313
      %v372 = vpack.c.b16 %v316, %v314
      %v373 = vpack.c.b16 %v319, %v317
      %v374 = vpack.c.b16 %v320, %v318
      %v375 = vpack.c.b16 %v323, %v321
      %v376 = vpack.c.b16 %v324, %v322
      %v377 = vpack.c.b16 %v327, %v325
      %v378 = vpack.c.b16 %v328, %v326
      %v379 = vpack.c.b16 %v331, %v329
      %v380 = vpack.c.b16 %v332, %v330
      %v381 = vpack.c.b16 %v335, %v333
      %v382 = vpack.c.b16 %v336, %v334
      %v383 = vpack.c.b16 %v339, %v337
      %v384 = vpack.c.b16 %v340, %v338
      %v385 = vpack.c.b16 %v343, %v341
      %v386 = vpack.c.b16 %v344, %v342
      %v387 = vpack.c.b16 %v347, %v345
      %v388 = vpack.c.b16 %v348, %v346
      %v389 = vpack.c.b16 %v351, %v349
      %v390 = vpack.c.b16 %v352, %v350
      %v391 = vpack.c.b16 %v355, %v353
      %v392 = vpack.c.b16 %v356, %v354
      %v393 = vpack.c.b16 %v359, %v357
      %v394 = vpack.c.b16 %v360, %v358
      %v395 = vpack.c.b16 %v363, %v361
      %v396 = vpack.c.b16 %v364, %v362
      %v461 = vunpack.c.l.b16 %v237
      %v462 = vunpack.c.l.b16 %v238
      %v463 = vunpack.c.l.b16 %v239
      %v464 = vunpack.c.l.b16 %v240
      %v465 = vunpack.c.l.b16 %v241
      %v466 = vunpack.c.l.b16 %v242
      %v467 = vunpack.c.l.b16 %v243
      %v468 = vunpack.c.l.b16 %v244
      %v469 = vunpack.c.l.b16 %v245
      %v470 = vunpack.c.l.b16 %v246
      %v471 = vunpack.c.l.b16 %v247
      %v472 = vunpack.c.l.b16 %v248
      %v473 = vunpack.c.l.b16 %v249
      %v474 = vunpack.c.l.b16 %v250
      %v475 = vunpack.c.l.b16 %v251
      %v476 = vunpack.c.l.b16 %v252
      %v477 = vunpack.c.l.b16 %v253
      %v478 = vunpack.c.l.b16 %v254
      %v479 = vunpack.c.l.b16 %v255
      %v480 = vunpack.c.l.b16 %v256
      %v481 = vunpack.c.l.b16 %v257
      %v482 = vunpack.c.l.b16 %v258
      %v483 = vunpack.c.l.b16 %v259
      %v484 = vunpack.c.l.b16 %v260
      %v485 = vunpack.c.l.b16 %v261
      %v486 = vunpack.c.l.b16 %v262
      %v487 = vunpack.c.l.b16 %v263
      %v488 = vunpack.c.l.b16 %v264
      %v489 = vunpack.c.l.b16 %v265
      %v490 = vunpack.c.l.b16 %v266
      %v491 = vunpack.c.l.b16 %v267
      %v492 = vunpack.c.l.b16 %v268
      %v493 = vpack.c.b16 %v462, %v461
      %v494 = vpack.c.b16 %v464, %v463
      %v495 = vpack.c.b16 %v466, %v465
      %v496 = vpack.c.b16 %v468, %v467
      %v497 = vpack.c.b16 %v470, %v469
      %v498 = vpack.c.b16 %v472, %v471
      %v499 = vpack.c.b16 %v474, %v473
      %v500 = vpack.c.b16 %v476, %v475
      %v501 = vpack.c.b16 %v478, %v477
      %v502 = vpack.c.b16 %v480, %v479
      %v503 = vpack.c.b16 %v482, %v481
      %v504 = vpack.c.b16 %v484, %v483
      %v505 = vpack.c.b16 %v486, %v485
      %v506 = vpack.c.b16 %v488, %v487
      %v507 = vpack.c.b16 %v490, %v489
      %v508 = vpack.c.b16 %v492, %v491
      %525 = vmatprep.subr.bf16.mxu0 0
      %526 = vmatpush1.bf16.msra.mxu0 %v500
      %527 = vmatprep.subr.bf16.mxu0 0
      %528 = vmatpush1.bf16.msra.mxu0 %v499
      %529 = vmatprep.subr.bf16.mxu0 0
      %530 = vmatpush1.bf16.msra.mxu0 %v498
      %531 = vmatprep.subr.bf16.mxu0 0
      %532 = vmatpush1.bf16.msra.mxu0 %v497
      %533 = vmatprep.subr.bf16.mxu0 0
      %534 = vmatpush1.bf16.msra.mxu0 %v496
      %535 = vmatprep.subr.bf16.mxu0 0
      %536 = vmatpush1.bf16.msra.mxu0 %v495
      %537 = vmatprep.subr.bf16.mxu0 0
      %538 = vmatpush1.bf16.msra.mxu0 %v494
      %539 = vmatprep.subr.bf16.mxu0 0
      %540 = vmatpush1.bf16.msra.mxu0 %v493
      %541 = vmatprep.subr.bf16.mxu0 0
      %542 = vmatpush2.bf16.msra.mxu0 %v508
      %543 = vmatprep.subr.bf16.mxu0 0
      %544 = vmatpush2.bf16.msra.mxu0 %v507
      %545 = vmatprep.subr.bf16.mxu0 0
      %546 = vmatpush2.bf16.msra.mxu0 %v506
      %547 = vmatprep.subr.bf16.mxu0 0
      %548 = vmatpush2.bf16.msra.mxu0 %v505
      %549 = vmatprep.subr.bf16.mxu0 0
      %550 = vmatpush2.bf16.msra.mxu0 %v504
      %551 = vmatprep.subr.bf16.mxu0 0
      %552 = vmatpush2.bf16.msra.mxu0 %v503
      %553 = vmatprep.subr.bf16.mxu0 0
      %554 = vmatpush2.bf16.msra.mxu0 %v502
      %555 = vmatprep.subr.bf16.mxu0 0
      %556 = vmatpush2.bf16.msra.mxu0 %v501
      %557 = vmatprep.mubr.bf16.mxu0 %v366
      %558 = vmatmul.mubr.bf16.gmra.mxu0 %v365
      %v559 = vpop.f32.mrf.mxu0
      %v560 = vadd.f32 0.0, %v559
      %v561 = vpop.f32.mrf.mxu0
      %v562 = vpop.f32.mrf.mxu0
      %v563 = vadd.f32 0.0, %v562
      %v564 = vpop.f32.mrf.mxu0
      %565 = vmatprep.mubr.bf16.mxu0 %v368
      %566 = vmatmul.mubr.bf16.gmra.mxu0 %v367
      %v567 = vpop.f32.mrf.mxu0
      %v568 = vadd.f32 0.0, %v567
      %v569 = vpop.f32.mrf.mxu0
      %v570 = vpop.f32.mrf.mxu0
      %v571 = vadd.f32 0.0, %v570
      %v572 = vpop.f32.mrf.mxu0
      %573 = vmatprep.mubr.bf16.mxu0 %v370
      %574 = vmatmul.mubr.bf16.gmra.mxu0 %v369
      %v575 = vpop.f32.mrf.mxu0
      %v576 = vadd.f32 0.0, %v575
      %v577 = vpop.f32.mrf.mxu0
      %v578 = vpop.f32.mrf.mxu0
      %v579 = vadd.f32 0.0, %v578
      %v580 = vpop.f32.mrf.mxu0
      %581 = vmatprep.mubr.bf16.mxu0 %v372
      %582 = vmatmul.mubr.bf16.gmra.mxu0 %v371
      %v583 = vpop.f32.mrf.mxu0
      %v584 = vadd.f32 0.0, %v583
      %v585 = vpop.f32.mrf.mxu0
      %v586 = vpop.f32.mrf.mxu0
      %v587 = vadd.f32 0.0, %v586
      %v588 = vpop.f32.mrf.mxu0
      %589 = vmatprep.mubr.bf16.mxu0 %v374
      %590 = vmatmul.mubr.bf16.gmra.mxu0 %v373
      %v591 = vpop.f32.mrf.mxu0
      %v592 = vadd.f32 0.0, %v591
      %v593 = vpop.f32.mrf.mxu0
      %v594 = vpop.f32.mrf.mxu0
      %v595 = vadd.f32 0.0, %v594
      %v596 = vpop.f32.mrf.mxu0
      %597 = vmatprep.mubr.bf16.mxu0 %v376
      %598 = vmatmul.mubr.bf16.gmra.mxu0 %v375
      %v599 = vpop.f32.mrf.mxu0
      %v600 = vadd.f32 0.0, %v599
      %v601 = vpop.f32.mrf.mxu0
      %v602 = vpop.f32.mrf.mxu0
      %v603 = vadd.f32 0.0, %v602
      %v604 = vpop.f32.mrf.mxu0
      %605 = vmatprep.mubr.bf16.mxu0 %v378
      %606 = vmatmul.mubr.bf16.gmra.mxu0 %v377
      %v607 = vpop.f32.mrf.mxu0
      %v608 = vadd.f32 0.0, %v607
      %v609 = vpop.f32.mrf.mxu0
      %v610 = vpop.f32.mrf.mxu0
      %v611 = vadd.f32 0.0, %v610
      %v612 = vpop.f32.mrf.mxu0
      %613 = vmatprep.mubr.bf16.mxu0 %v380
      %614 = vmatmul.mubr.bf16.gmra.mxu0 %v379
      %v615 = vpop.f32.mrf.mxu0
      %v616 = vadd.f32 0.0, %v615
      %v617 = vpop.f32.mrf.mxu0
      %v618 = vpop.f32.mrf.mxu0
      %v619 = vadd.f32 0.0, %v618
      %v620 = vpop.f32.mrf.mxu0
      %621 = vmatprep.mubr.bf16.mxu0 %v382
      %622 = vmatmul.mubr.bf16.gmra.mxu0 %v381
      %v623 = vpop.f32.mrf.mxu0
      %v624 = vadd.f32 0.0, %v623
      %v625 = vpop.f32.mrf.mxu0
      %v626 = vpop.f32.mrf.mxu0
      %v627 = vadd.f32 0.0, %v626
      %v628 = vpop.f32.mrf.mxu0
      %629 = vmatprep.mubr.bf16.mxu0 %v384
      %630 = vmatmul.mubr.bf16.gmra.mxu0 %v383
      %v631 = vpop.f32.mrf.mxu0
      %v632 = vadd.f32 0.0, %v631
      %v633 = vpop.f32.mrf.mxu0
      %v634 = vpop.f32.mrf.mxu0
      %v635 = vadd.f32 0.0, %v634
      %v636 = vpop.f32.mrf.mxu0
      %637 = vmatprep.mubr.bf16.mxu0 %v386
      %638 = vmatmul.mubr.bf16.gmra.mxu0 %v385
      %v639 = vpop.f32.mrf.mxu0
      %v640 = vadd.f32 0.0, %v639
      %v641 = vpop.f32.mrf.mxu0
      %v642 = vpop.f32.mrf.mxu0
      %v643 = vadd.f32 0.0, %v642
      %v644 = vpop.f32.mrf.mxu0
      %645 = vmatprep.mubr.bf16.mxu0 %v388
      %646 = vmatmul.mubr.bf16.gmra.mxu0 %v387
      %v647 = vpop.f32.mrf.mxu0
      %v648 = vadd.f32 0.0, %v647
      %v649 = vpop.f32.mrf.mxu0
      %v650 = vpop.f32.mrf.mxu0
      %v651 = vadd.f32 0.0, %v650
      %v652 = vpop.f32.mrf.mxu0
      %653 = vmatprep.mubr.bf16.mxu0 %v390
      %654 = vmatmul.mubr.bf16.gmra.mxu0 %v389
      %v655 = vpop.f32.mrf.mxu0
      %v656 = vadd.f32 0.0, %v655
      %v657 = vpop.f32.mrf.mxu0
      %v658 = vpop.f32.mrf.mxu0
      %v659 = vadd.f32 0.0, %v658
      %v660 = vpop.f32.mrf.mxu0
      %661 = vmatprep.mubr.bf16.mxu0 %v392
      %662 = vmatmul.mubr.bf16.gmra.mxu0 %v391
      %v663 = vpop.f32.mrf.mxu0
      %v664 = vadd.f32 0.0, %v663
      %v665 = vpop.f32.mrf.mxu0
      %v666 = vpop.f32.mrf.mxu0
      %v667 = vadd.f32 0.0, %v666
      %v668 = vpop.f32.mrf.mxu0
      %669 = vmatprep.mubr.bf16.mxu0 %v394
      %670 = vmatmul.mubr.bf16.gmra.mxu0 %v393
      %v671 = vpop.f32.mrf.mxu0
      %v672 = vadd.f32 0.0, %v671
      %v673 = vpop.f32.mrf.mxu0
      %v674 = vpop.f32.mrf.mxu0
      %v675 = vadd.f32 0.0, %v674
      %v676 = vpop.f32.mrf.mxu0
      %677 = vmatprep.mubr.bf16.mxu0 %v396
      %678 = vmatmul.mubr.bf16.gmra.mxu0 %v395
      %v679 = vpop.f32.mrf.mxu0
      %v680 = vadd.f32 0.0, %v679
      %v681 = vpop.f32.mrf.mxu0
      %v682 = vpop.f32.mrf.mxu0
      %v683 = vadd.f32 0.0, %v682
      %v684 = vpop.f32.mrf.mxu0
      %685 = vdwg.mxu0
      %v686 = vld [vmem:[%s2] sm:$0x1]
      %v688 = vlaneseq
      %v689 = vshrl.u32 %v688, 7
      %v690 = vsub.s32 0, %v689
      %v691 = vrot.slane %v686, %v690
      %v693 = vmul.f32 %v560, %v691
      %v694 = vmul.f32 %v563, %v691
      %v695 = vmul.f32 %v568, %v691
      %v696 = vmul.f32 %v571, %v691
      %v697 = vmul.f32 %v576, %v691
      %v698 = vmul.f32 %v579, %v691
      %v699 = vmul.f32 %v584, %v691
      %v700 = vmul.f32 %v587, %v691
      %v701 = vmul.f32 %v592, %v691
      %v702 = vmul.f32 %v595, %v691
      %v703 = vmul.f32 %v600, %v691
      %v704 = vmul.f32 %v603, %v691
      %v705 = vmul.f32 %v608, %v691
      %v706 = vmul.f32 %v611, %v691
      %v707 = vmul.f32 %v616, %v691
      %v708 = vmul.f32 %v619, %v691
      %v709 = vmul.f32 %v624, %v691
      %v710 = vmul.f32 %v627, %v691
      %v711 = vmul.f32 %v632, %v691
      %v712 = vmul.f32 %v635, %v691
      %v713 = vmul.f32 %v640, %v691
      %v714 = vmul.f32 %v643, %v691
      %v715 = vmul.f32 %v648, %v691
      %v716 = vmul.f32 %v651, %v691
      %v717 = vmul.f32 %v656, %v691
      %v718 = vmul.f32 %v659, %v691
      %v719 = vmul.f32 %v664, %v691
      %v720 = vmul.f32 %v667, %v691
      %v721 = vmul.f32 %v672, %v691
      %v722 = vmul.f32 %v675, %v691
      %v723 = vmul.f32 %v680, %v691
      %v724 = vmul.f32 %v683, %v691
      %v725 = vld [vmem:[%s3] sm:$0x1]
      %v727 = vlaneseq
      %v728 = vshrl.u32 %v727, 7
      %v729 = vsub.s32 0, %v728
      %v730 = vrot.slane %v725, %v729
      %v732 = vadd.f32 %v693, %v730
      %v733 = vadd.f32 %v694, %v730
      %v734 = vadd.f32 %v695, %v730
      %v735 = vadd.f32 %v696, %v730
      %v736 = vadd.f32 %v697, %v730
      %v737 = vadd.f32 %v698, %v730
      %v738 = vadd.f32 %v699, %v730
      %v739 = vadd.f32 %v700, %v730
      %v740 = vadd.f32 %v701, %v730
      %v741 = vadd.f32 %v702, %v730
      %v742 = vadd.f32 %v703, %v730
      %v743 = vadd.f32 %v704, %v730
      %v744 = vadd.f32 %v705, %v730
      %v745 = vadd.f32 %v706, %v730
      %v746 = vadd.f32 %v707, %v730
      %v747 = vadd.f32 %v708, %v730
      %v748 = vadd.f32 %v709, %v730
      %v749 = vadd.f32 %v710, %v730
      %v750 = vadd.f32 %v711, %v730
      %v751 = vadd.f32 %v712, %v730
      %v752 = vadd.f32 %v713, %v730
      %v753 = vadd.f32 %v714, %v730
      %v754 = vadd.f32 %v715, %v730
      %v755 = vadd.f32 %v716, %v730
      %v756 = vadd.f32 %v717, %v730
      %v757 = vadd.f32 %v718, %v730
      %v758 = vadd.f32 %v719, %v730
      %v759 = vadd.f32 %v720, %v730
      %v760 = vadd.f32 %v721, %v730
      %v761 = vadd.f32 %v722, %v730
      %v762 = vadd.f32 %v723, %v730
      %v763 = vadd.f32 %v724, %v730
      %v764 = vmax.f32 %v732, 0.0
      %v765 = vmax.f32 %v733, 0.0
      %v766 = vmax.f32 %v734, 0.0
      %v767 = vmax.f32 %v735, 0.0
      %v768 = vmax.f32 %v736, 0.0
      %v769 = vmax.f32 %v737, 0.0
      %v770 = vmax.f32 %v738, 0.0
      %v771 = vmax.f32 %v739, 0.0
      %v772 = vmax.f32 %v740, 0.0
      %v773 = vmax.f32 %v741, 0.0
      %v774 = vmax.f32 %v742, 0.0
      %v775 = vmax.f32 %v743, 0.0
      %v776 = vmax.f32 %v744, 0.0
      %v777 = vmax.f32 %v745, 0.0
      %v778 = vmax.f32 %v746, 0.0
      %v779 = vmax.f32 %v747, 0.0
      %v780 = vmax.f32 %v748, 0.0
      %v781 = vmax.f32 %v749, 0.0
      %v782 = vmax.f32 %v750, 0.0
      %v783 = vmax.f32 %v751, 0.0
      %v784 = vmax.f32 %v752, 0.0
      %v785 = vmax.f32 %v753, 0.0
      %v786 = vmax.f32 %v754, 0.0
      %v787 = vmax.f32 %v755, 0.0
      %v788 = vmax.f32 %v756, 0.0
      %v789 = vmax.f32 %v757, 0.0
      %v790 = vmax.f32 %v758, 0.0
      %v791 = vmax.f32 %v759, 0.0
      %v792 = vmax.f32 %v760, 0.0
      %v793 = vmax.f32 %v761, 0.0
      %v794 = vmax.f32 %v762, 0.0
      %v795 = vmax.f32 %v763, 0.0
      %v796 = vpack.c.bf16 %v765, %v764
      %v797 = vpack.c.bf16 %v767, %v766
      %v798 = vpack.c.bf16 %v769, %v768
      %v799 = vpack.c.bf16 %v771, %v770
      %v800 = vpack.c.bf16 %v773, %v772
      %v801 = vpack.c.bf16 %v775, %v774
      %v802 = vpack.c.bf16 %v777, %v776
      %v803 = vpack.c.bf16 %v779, %v778
      %v804 = vpack.c.bf16 %v781, %v780
      %v805 = vpack.c.bf16 %v783, %v782
      %v806 = vpack.c.bf16 %v785, %v784
      %v807 = vpack.c.bf16 %v787, %v786
      %v808 = vpack.c.bf16 %v789, %v788
      %v809 = vpack.c.bf16 %v791, %v790
      %v810 = vpack.c.bf16 %v793, %v792
      %v811 = vpack.c.bf16 %v795, %v794
      %v828 = vunpack.c.l.b16 %v796
      %v829 = vunpack.c.h.b16 %v796
      %v830 = vunpack.c.l.b16 %v797
      %v831 = vunpack.c.h.b16 %v797
      %v832 = vunpack.c.l.b16 %v798
      %v833 = vunpack.c.h.b16 %v798
      %v834 = vunpack.c.l.b16 %v799
      %v835 = vunpack.c.h.b16 %v799
      %v836 = vunpack.c.l.b16 %v800
      %v837 = vunpack.c.h.b16 %v800
      %v838 = vunpack.c.l.b16 %v801
      %v839 = vunpack.c.h.b16 %v801
      %v840 = vunpack.c.l.b16 %v802
      %v841 = vunpack.c.h.b16 %v802
      %v842 = vunpack.c.l.b16 %v803
      %v843 = vunpack.c.h.b16 %v803
      %v844 = vunpack.c.l.b16 %v804
      %v845 = vunpack.c.h.b16 %v804
      %v846 = vunpack.c.l.b16 %v805
      %v847 = vunpack.c.h.b16 %v805
      %v848 = vunpack.c.l.b16 %v806
      %v849 = vunpack.c.h.b16 %v806
      %v850 = vunpack.c.l.b16 %v807
      %v851 = vunpack.c.h.b16 %v807
      %v852 = vunpack.c.l.b16 %v808
      %v853 = vunpack.c.h.b16 %v808
      %v854 = vunpack.c.l.b16 %v809
      %v855 = vunpack.c.h.b16 %v809
      %v856 = vunpack.c.l.b16 %v810
      %v857 = vunpack.c.h.b16 %v810
      %v858 = vunpack.c.l.b16 %v811
      %v859 = vunpack.c.h.b16 %v811
      %v860 = vpack.c.b16 %v828, %v828
      %v861 = vpack.c.b16 %v829, %v829
      %v862 = vpack.c.b16 %v830, %v830
      %v863 = vpack.c.b16 %v831, %v831
      %v864 = vpack.c.b16 %v832, %v832
      %v865 = vpack.c.b16 %v833, %v833
      %v866 = vpack.c.b16 %v834, %v834
      %v867 = vpack.c.b16 %v835, %v835
      %v868 = vpack.c.b16 %v836, %v836
      %v869 = vpack.c.b16 %v837, %v837
      %v870 = vpack.c.b16 %v838, %v838
      %v871 = vpack.c.b16 %v839, %v839
      %v872 = vpack.c.b16 %v840, %v840
      %v873 = vpack.c.b16 %v841, %v841
      %v874 = vpack.c.b16 %v842, %v842
      %v875 = vpack.c.b16 %v843, %v843
      %v876 = vpack.c.b16 %v844, %v844
      %v877 = vpack.c.b16 %v845, %v845
      %v878 = vpack.c.b16 %v846, %v846
      %v879 = vpack.c.b16 %v847, %v847
      %v880 = vpack.c.b16 %v848, %v848
      %v881 = vpack.c.b16 %v849, %v849
      %v882 = vpack.c.b16 %v850, %v850
      %v883 = vpack.c.b16 %v851, %v851
      %v884 = vpack.c.b16 %v852, %v852
      %v885 = vpack.c.b16 %v853, %v853
      %v886 = vpack.c.b16 %v854, %v854
      %v887 = vpack.c.b16 %v855, %v855
      %v888 = vpack.c.b16 %v856, %v856
      %v889 = vpack.c.b16 %v857, %v857
      %v890 = vpack.c.b16 %v858, %v858
      %v891 = vpack.c.b16 %v859, %v859
      %924 = vst [vmem:[%s202] sm:$0xf] %v860
      %925 = vst [vmem:[%s202 + $0x4] sm:$0xf] %v861
      %926 = vst [vmem:[%s202 + $0x8] sm:$0xf] %v862
      %927 = vst [vmem:[%s202 + $0xc] sm:$0xf] %v863
      %928 = vst [vmem:[%s202 + $0x10] sm:$0xf] %v864
      %929 = vst [vmem:[%s202 + $0x14] sm:$0xf] %v865
      %930 = vst [vmem:[%s202 + $0x18] sm:$0xf] %v866
      %931 = vst [vmem:[%s202 + $0x1c] sm:$0xf] %v867
      %932 = vst [vmem:[%s202 + $0x20] sm:$0xf] %v868
      %933 = vst [vmem:[%s202 + $0x24] sm:$0xf] %v869
      %934 = vst [vmem:[%s202 + $0x28] sm:$0xf] %v870
      %935 = vst [vmem:[%s202 + $0x2c] sm:$0xf] %v871
      %936 = vst [vmem:[%s202 + $0x30] sm:$0xf] %v872
      %937 = vst [vmem:[%s202 + $0x34] sm:$0xf] %v873
      %938 = vst [vmem:[%s202 + $0x38] sm:$0xf] %v874
      %939 = vst [vmem:[%s202 + $0x3c] sm:$0xf] %v875
      %940 = vst [vmem:[%s202 + $0x40] sm:$0xf] %v876
      %941 = vst [vmem:[%s202 + $0x44] sm:$0xf] %v877
      %942 = vst [vmem:[%s202 + $0x48] sm:$0xf] %v878
      %943 = vst [vmem:[%s202 + $0x4c] sm:$0xf] %v879
      %944 = vst [vmem:[%s202 + $0x50] sm:$0xf] %v880
      %945 = vst [vmem:[%s202 + $0x54] sm:$0xf] %v881
      %946 = vst [vmem:[%s202 + $0x58] sm:$0xf] %v882
      %947 = vst [vmem:[%s202 + $0x5c] sm:$0xf] %v883
      %948 = vst [vmem:[%s202 + $0x60] sm:$0xf] %v884
      %949 = vst [vmem:[%s202 + $0x64] sm:$0xf] %v885
      %950 = vst [vmem:[%s202 + $0x68] sm:$0xf] %v886
      %951 = vst [vmem:[%s202 + $0x6c] sm:$0xf] %v887
      %952 = vst [vmem:[%s202 + $0x70] sm:$0xf] %v888
      %953 = vst [vmem:[%s202 + $0x74] sm:$0xf] %v889
      %954 = vst [vmem:[%s202 + $0x78] sm:$0xf] %v890
      %955 = vst [vmem:[%s202 + $0x7c] sm:$0xf] %v891
      %s956 = smul.u32 32, %s15
      %p957 = scmp.lt.s32.totalorder %s956, 63
      %s958 = scalar_select %p957, %s956, 63
      %s959 = smul.addr %s958, 4
      %s960 = scalar_lea.vmem %s4, %s959
      // Predicated region
      $region37: #{_stem.1} parent=35 // pred_check
        %p961 = pneg %p122
      $region38: #{_stem.1} parent=35 // pred_check_branch
        %963 = sbr.rel (%p961) target = $region40
      $region39: #{_stem.1} parent=35 // pred_region
        %s964 = smul.u32 32, %s15
      $region40: #{_stem.1} parent=35 // pred_fallthru
        _
    $region36: #{_stem.1} parent=5 // pred_fallthru
      _
    %p965 = scmp.le.s32.totalorder 2, %s10
    // Predicated region
    $region41: #{_stem.1} parent=5 // pred_check
      %p966 = pneg %p965
    $region42: #{_stem.1} parent=5 // pred_check_branch
      %968 = sbr.rel (%p966) target = $region44
    $region43: #{_stem.1} parent=5 // pred_region
      %s969 = ssub.s32 %s10, 2
      // Predicated region
      $region45: #{_stem.1} parent=43 // pred_check
        %p970 = pneg %p128
      $region46: #{_stem.1} parent=43 // pred_check_branch
        %972 = sbr.rel (%p970) target = $region48
      $region47: #{_stem.1} parent=43 // pred_region
        %s973 = smul.u32 32, %s16
        %p974 = scmp.lt.s32.totalorder %s973, 63
        %s975 = scalar_select %p974, %s973, 63
        %s976 = smul.addr %s975, 4
        %s977 = scalar_lea.vmem %s4, %s976
      $region48: #{_stem.1} parent=43 // pred_fallthru
        _
    $region44: #{_stem.1} parent=5 // pred_fallthru
      _
  $region6: #{_stem.1} parent=0 // loop_footer
    %s14 = sadd.s32 1, %s10
  $region7: #{_stem.1} parent=0 // loop_footer_branch
    %9 = sbr.rel target = $region3
  $region8: #{_stem.1} parent=0 // loop_exit
    _

</llo_original>
